<compile_context>
chip_gen: v5e
topology: v5e:2x2
jax: 0.10.0
libtpu: 0.0.40
codegen_flags: <defaults>
</compile_context>

<pallas_src>
import functools

import jax
import jax.numpy as jnp
from jax.experimental import pallas as pl
from jax.experimental.pallas import tpu as pltpu

# Constants that are globals in the original PyTorch file.
VOCAB_SIZE = 16
D_MODEL = 32
MASK = 0            # mask_embedding value (0 is "not False" -> mask path active)
MET_TOKEN_ID = 5    # torch.full(met.shape, 5) -> row 5 of the embedding table

_VMEM_LIMIT_BYTES = 32 * 1024 * 1024   # safe on v5e/v6e/v7x (all >= 64 MiB physical)
_MAX_R_BLK = 8192                      # per-step VMEM stays well inside 32 MiB


def _round_up(x, m):
    return (x + m - 1) // m * m


def _embed_no_met_kernel(seq_ref, rep_ref, vid_ref, btab_ref, out_ref, *,
                         mask_value, apply_mask):
    # seq_ref : (Rb, PACK) int32   -- PACK tokens per 128-lane output row
    # rep_ref : (PACK, PACK*V) f32 -- kron(eye(PACK), ones(1, V))
    # vid_ref : (1, PACK*V)  f32   -- [0..V-1] tiled PACK times
    # btab_ref: (PACK*V, PACK*D) f32, block-diagonal kron(eye(PACK), table)
    # out_ref : (Rb, PACK*D) f32   -- packed, lane-dense output
    ids_f = seq_ref[...].astype(jnp.float32)                               # (Rb, PACK)
    # Replicate each id across its 16-lane vocab segment on the MXU (exact:
    # small-int x 0/1 operands).
    ids_rep = jnp.dot(ids_f, rep_ref[...],
                      preferred_element_type=jnp.float32)                  # (Rb, PACK*V)
    onehot = (ids_rep == vid_ref[...]).astype(jnp.float32)                 # (Rb, PACK*V)
    # One MXU gather: block-diagonal table -> packed embeddings.
    seq_emb = jnp.dot(onehot, btab_ref[...],
                      preferred_element_type=jnp.float32)                  # (Rb, PACK*D)
    if apply_mask:
        # PyTorch quirk: mask computed on the embedded float values; out * mask.
        mask = (seq_emb != jnp.float32(mask_value)).astype(jnp.float32)
        out = seq_emb * mask
    else:
        out = seq_emb
    out_ref[...] = out


def _embed_with_met_kernel(seq_ref, met_ref, rep_ref, vid_ref, btab_ref,
                           mrow_ref, out_ref, *, mask_value, apply_mask):
    # met_ref : (Rb, PACK) f32
    # mrow_ref: (PACK, PACK*D) f32 -- kron(eye(PACK), table[MET_TOKEN_ID])
    ids_f = seq_ref[...].astype(jnp.float32)
    ids_rep = jnp.dot(ids_f, rep_ref[...], preferred_element_type=jnp.float32)
    onehot = (ids_rep == vid_ref[...]).astype(jnp.float32)
    seq_emb = jnp.dot(onehot, btab_ref[...], preferred_element_type=jnp.float32)
    # met contribution on the MXU: met (Rb, PACK) @ mrow (PACK, PACK*D).
    met_term = jnp.dot(met_ref[...], mrow_ref[...],
                       preferred_element_type=jnp.float32)
    out = seq_emb + met_term
    if apply_mask:
        mask = (seq_emb != jnp.float32(mask_value)).astype(jnp.float32)
        out = out * mask
    out_ref[...] = out


def embedding_forward(seq, table, met=None, *, mask_embedding=MASK,
                      tokens_per_block=16384):
    """JAX/Pallas equivalent of Embedding.forward(seq, met)."""
    B, S = seq.shape
    V, D = table.shape
    if 128 % D != 0:
        # TODO(synk): lane-packing assumes D divides 128 (true for D_MODEL=32).
        raise NotImplementedError("D must divide 128 for lane-packed layout")
    PACK = 128 // D
    apply_mask = mask_embedding is not False
    mask_value = float(mask_embedding) if apply_mask else 0.0

    N = B * S
    R = -(-N // PACK)                                    # packed rows needed
    r_blk = min(max(8, tokens_per_block // PACK), _round_up(R, 8))
    r_blk = min(_round_up(r_blk, 8), _MAX_R_BLK)
    if R > 8:
        # Ensure >= 2 grid steps when there is enough work, so
        # dimension_semantics=("parallel",) spans both TensorCores on v7x.
        r_blk = min(r_blk, _round_up(-(-R // 2), 8))
    Rp = _round_up(R, r_blk)
    Np = Rp * PACK
    grid = (Rp // r_blk,)

    seq_flat = seq.reshape(N).astype(jnp.int32)
    if Np != N:
        seq_flat = jnp.pad(seq_flat, (0, Np - N))        # no-op for aligned shapes
    seq_p = seq_flat.reshape(Rp, PACK)

    table_f32 = table.astype(jnp.float32)
    eye = jnp.eye(PACK, dtype=jnp.float32)
    # Block-diagonal table: btab[p*V+v, p*D+d] = table[v, d]        -> (PACK*V, 128)
    btab = jnp.kron(eye, table_f32)
    # Id replication matrix: rep[p, q*V+j] = (p == q)               -> (PACK, PACK*V)
    rep = jnp.kron(eye, jnp.ones((1, V), jnp.float32))
    # Lane vocab ids: vid[0, p*V+j] = j                              -> (1, PACK*V)
    vid = jnp.tile(jnp.arange(V, dtype=jnp.float32)[None, :], (1, PACK))

    seq_spec = pl.BlockSpec((r_blk, PACK), lambda i: (i, 0))
    rep_spec = pl.BlockSpec((PACK, PACK * V), lambda i: (0, 0))
    vid_spec = pl.BlockSpec((1, PACK * V), lambda i: (0, 0))
    btab_spec = pl.BlockSpec((PACK * V, PACK * D), lambda i: (0, 0))
    out_spec = pl.BlockSpec((r_blk, PACK * D), lambda i: (i, 0))
    out_shape = jax.ShapeDtypeStruct((Rp, PACK * D), jnp.float32)
    params = pltpu.CompilerParams(
        dimension_semantics=("parallel",),
        vmem_limit_bytes=_VMEM_LIMIT_BYTES,
    )

    if met is None:
        out = pl.pallas_call(
            functools.partial(_embed_no_met_kernel,
                              mask_value=mask_value, apply_mask=apply_mask),
            out_shape=out_shape,
            grid=grid,
            in_specs=[seq_spec, rep_spec, vid_spec, btab_spec],
            out_specs=out_spec,
            compiler_params=params,
        )(seq_p, rep, vid, btab)
    else:
        met_flat = met.reshape(N).astype(jnp.float32)
        if Np != N:
            met_flat = jnp.pad(met_flat, (0, Np - N))
        met_p = met_flat.reshape(Rp, PACK)
        # mrow[p, q*D+d] = (p == q) * table[MET_TOKEN_ID, d]         -> (PACK, 128)
        mrow = jnp.kron(eye, table_f32[MET_TOKEN_ID:MET_TOKEN_ID + 1, :])
        met_spec = pl.BlockSpec((r_blk, PACK), lambda i: (i, 0))
        mrow_spec = pl.BlockSpec((PACK, PACK * D), lambda i: (0, 0))
        out = pl.pallas_call(
            functools.partial(_embed_with_met_kernel,
                              mask_value=mask_value, apply_mask=apply_mask),
            out_shape=out_shape,
            grid=grid,
            in_specs=[seq_spec, met_spec, rep_spec, vid_spec, btab_spec, mrow_spec],
            out_specs=out_spec,
            compiler_params=params,
        )(seq_p, met_p, rep, vid, btab, mrow)

    # (Rp, PACK*D) -> (Np, D) is a pure row-major reinterpretation (free).
    return out.reshape(Np, D)[:N].reshape(B, S, D)


def reference_forward(seq, table, met=None, mask_embedding=MASK):
    """Pure-JAX reference mirroring the PyTorch forward semantics."""
    seq_emb = table[seq]                                          # (B, S, D)
    if met is not None:
        emb_met = table[jnp.full(met.shape, MET_TOKEN_ID, dtype=jnp.int32)]
        out = seq_emb + met[..., None] * emb_met
    else:
        out = seq_emb
    if mask_embedding is False:
        return out
    mask = (seq_emb != jnp.float32(mask_embedding)).astype(jnp.float32)
    return out * mask


if __name__ == "__main__":
    key = jax.random.PRNGKey(0)
    k_tab, k_seq = jax.random.split(key)

    # nn.Embedding(vocab_size, embed_dim) weight, init.uniform_(-0.05, 0.05)
    table = jax.random.uniform(
        k_tab, (VOCAB_SIZE, D_MODEL), dtype=jnp.float32, minval=-0.05, maxval=0.05
    )

    # (2, 64): tiny, 2-step grid; (2, 1056): ragged multi-step;
    # (4, 8192): exercises the full 4096-row (2 MiB) block configuration.
    for (B, S) in [(2, 64), (2, 1056), (4, 8192)]:
        k_s, k_m = jax.random.split(jax.random.fold_in(k_seq, S))
        seq = jax.random.randint(k_s, (B, S), 0, VOCAB_SIZE, dtype=jnp.int32)
        met = jax.random.normal(k_m, (B, S), dtype=jnp.float32)

        out_met = jax.block_until_ready(embedding_forward(seq, table, met))
        out_nomet = jax.block_until_ready(embedding_forward(seq, table))

        ref_met = reference_forward(seq, table, met)
        ref_nomet = reference_forward(seq, table)

        assert out_met.shape == (B, S, D_MODEL) and out_met.dtype == jnp.float32
        assert out_nomet.shape == (B, S, D_MODEL) and out_nomet.dtype == jnp.float32
        # Gather path uses only 0/1-coefficient MXU dots -> tight tolerance.
        assert jnp.allclose(out_nomet, ref_nomet, atol=2e-6, rtol=1e-6), (
            float(jnp.max(jnp.abs(out_nomet - ref_nomet))))
        # met term uses an f32 MXU dot (multi-pass bf16 decomposition) -> slightly looser.
        assert jnp.allclose(out_met, ref_met, atol=2e-5, rtol=1e-5), (
            float(jnp.max(jnp.abs(out_met - ref_met))))

    # mask_embedding=False branch.
    k_s, k_m = jax.random.split(jax.random.fold_in(k_seq, 7))
    seq = jax.random.randint(k_s, (2, 64), 0, VOCAB_SIZE, dtype=jnp.int32)
    met = jax.random.normal(k_m, (2, 64), dtype=jnp.float32)
    out_nm = jax.block_until_ready(
        embedding_forward(seq, table, met, mask_embedding=False))
    ref_nm = reference_forward(seq, table, met, mask_embedding=False)
    assert jnp.allclose(out_nm, ref_nm, atol=2e-5, rtol=1e-5)

    print("KERNEL_OK")
</pallas_src>

<mosaic_0001>
module attributes {stable_mosaic.version = 11 : i64} {
  func.func @_embed_with_met_kernel(%arg0: i32, %arg1: memref<16x4xi32, #tpu.memory_space<vmem>>, %arg2: memref<16x4xf32, #tpu.memory_space<vmem>>, %arg3: memref<4x64xf32, #tpu.memory_space<vmem>>, %arg4: memref<1x64xf32, #tpu.memory_space<vmem>>, %arg5: memref<64x128xf32, #tpu.memory_space<vmem>>, %arg6: memref<4x128xf32, #tpu.memory_space<vmem>>, %arg7: memref<16x128xf32, #tpu.memory_space<vmem>>) attributes {dimension_semantics = [#tpu.dimension_semantics<parallel>], iteration_bounds = array<i64: 2>, scalar_prefetch = 0 : i64, scratch_operands = 0 : i64, tpu.core_type = #tpu.core_type<tc>, window_params = [{transform_indices = @transform_0, window_bounds = array<i64: 16, 4>}, {transform_indices = @transform_1, window_bounds = array<i64: 16, 4>}, {pipeline_mode = #tpu.pipeline_mode<synchronous>, transform_indices = @transform_2, window_bounds = array<i64: 4, 64>}, {pipeline_mode = #tpu.pipeline_mode<synchronous>, transform_indices = @transform_3, window_bounds = array<i64: 1, 64>}, {pipeline_mode = #tpu.pipeline_mode<synchronous>, transform_indices = @transform_4, window_bounds = array<i64: 64, 128>}, {pipeline_mode = #tpu.pipeline_mode<synchronous>, transform_indices = @transform_5, window_bounds = array<i64: 4, 128>}, {transform_indices = @transform_6, window_bounds = array<i64: 16, 128>}]} {
    %c0 = arith.constant 0 : index
    %c0_0 = arith.constant 0 : index
    %0 = vector.load %arg1[%c0, %c0_0] : memref<16x4xi32, #tpu.memory_space<vmem>>, vector<16x4xi32>
    %1 = arith.sitofp %0 : vector<16x4xi32> to vector<16x4xf32>
    %c0_1 = arith.constant 0 : index
    %c0_2 = arith.constant 0 : index
    %2 = vector.load %arg3[%c0_1, %c0_2] : memref<4x64xf32, #tpu.memory_space<vmem>>, vector<4x64xf32>
    %cst = arith.constant dense<0.000000e+00> : vector<16x64xf32>
    %3 = tpu.matmul %1, %2, %cst {dimension_numbers = #tpu.dot_dimension_numbers<[1], [0], [0], [1], [0, 0, 1, 1], [], []>} : vector<16x4xf32>, vector<4x64xf32>, vector<16x64xf32> -> vector<16x64xf32>
    %c0_3 = arith.constant 0 : index
    %c0_4 = arith.constant 0 : index
    %4 = vector.load %arg4[%c0_3, %c0_4] : memref<1x64xf32, #tpu.memory_space<vmem>>, vector<1x64xf32>
    %5 = vector.broadcast %4 : vector<1x64xf32> to vector<16x64xf32>
    %6 = arith.cmpf oeq, %3, %5 : vector<16x64xf32>
    %7 = arith.extui %6 : vector<16x64xi1> to vector<16x64xi32>
    %8 = arith.sitofp %7 : vector<16x64xi32> to vector<16x64xf32>
    %c0_5 = arith.constant 0 : index
    %c0_6 = arith.constant 0 : index
    %9 = vector.load %arg5[%c0_5, %c0_6] : memref<64x128xf32, #tpu.memory_space<vmem>>, vector<64x128xf32>
    %cst_7 = arith.constant dense<0.000000e+00> : vector<16x128xf32>
    %10 = tpu.matmul %8, %9, %cst_7 {dimension_numbers = #tpu.dot_dimension_numbers<[1], [0], [0], [1], [0, 0, 1, 1], [], []>} : vector<16x64xf32>, vector<64x128xf32>, vector<16x128xf32> -> vector<16x128xf32>
    %c0_8 = arith.constant 0 : index
    %c0_9 = arith.constant 0 : index
    %11 = vector.load %arg2[%c0_8, %c0_9] : memref<16x4xf32, #tpu.memory_space<vmem>>, vector<16x4xf32>
    %c0_10 = arith.constant 0 : index
    %c0_11 = arith.constant 0 : index
    %12 = vector.load %arg6[%c0_10, %c0_11] : memref<4x128xf32, #tpu.memory_space<vmem>>, vector<4x128xf32>
    %cst_12 = arith.constant dense<0.000000e+00> : vector<16x128xf32>
    %13 = tpu.matmul %11, %12, %cst_12 {dimension_numbers = #tpu.dot_dimension_numbers<[1], [0], [0], [1], [0, 0, 1, 1], [], []>} : vector<16x4xf32>, vector<4x128xf32>, vector<16x128xf32> -> vector<16x128xf32>
    %14 = arith.addf %10, %13 : vector<16x128xf32>
    %cst_13 = arith.constant 0.000000e+00 : f32
    %15 = vector.broadcast %cst_13 : f32 to vector<16x128xf32>
    %16 = arith.cmpf one, %10, %15 : vector<16x128xf32>
    %17 = arith.extui %16 : vector<16x128xi1> to vector<16x128xi32>
    %18 = arith.sitofp %17 : vector<16x128xi32> to vector<16x128xf32>
    %19 = arith.mulf %14, %18 : vector<16x128xf32>
    %c0_14 = arith.constant 0 : index
    %c0_15 = arith.constant 0 : index
    %20 = vector.load %arg7[%c0_14, %c0_15] : memref<16x128xf32, #tpu.memory_space<vmem>>, vector<16x128xf32>
    tpu.vector_store %arg7[%c0_14, %c0_15], %19 {strides = array<i32>} : memref<16x128xf32, #tpu.memory_space<vmem>>, vector<16x128xf32>,
    return
  }
  func.func @transform_0(%arg0: i32) -> (i32, i32) {
    %c0_i32 = arith.constant 0 : i32
    %c0_i32_0 = arith.constant 0 : i32
    return %arg0, %c0_i32 : i32, i32
  }
  func.func @transform_1(%arg0: i32) -> (i32, i32) {
    %c0_i32 = arith.constant 0 : i32
    %c0_i32_0 = arith.constant 0 : i32
    return %arg0, %c0_i32 : i32, i32
  }
  func.func @transform_2(%arg0: i32) -> (i32, i32) {
    %c0_i32 = arith.constant 0 : i32
    %c0_i32_0 = arith.constant 0 : i32
    %c0_i32_1 = arith.constant 0 : i32
    return %c0_i32, %c0_i32_0 : i32, i32
  }
  func.func @transform_3(%arg0: i32) -> (i32, i32) {
    %c0_i32 = arith.constant 0 : i32
    %c0_i32_0 = arith.constant 0 : i32
    %c0_i32_1 = arith.constant 0 : i32
    return %c0_i32, %c0_i32_0 : i32, i32
  }
  func.func @transform_4(%arg0: i32) -> (i32, i32) {
    %c0_i32 = arith.constant 0 : i32
    %c0_i32_0 = arith.constant 0 : i32
    %c0_i32_1 = arith.constant 0 : i32
    return %c0_i32, %c0_i32_0 : i32, i32
  }
  func.func @transform_5(%arg0: i32) -> (i32, i32) {
    %c0_i32 = arith.constant 0 : i32
    %c0_i32_0 = arith.constant 0 : i32
    %c0_i32_1 = arith.constant 0 : i32
    return %c0_i32, %c0_i32_0 : i32, i32
  }
  func.func @transform_6(%arg0: i32) -> (i32, i32) {
    %c0_i32 = arith.constant 0 : i32
    %c0_i32_0 = arith.constant 0 : i32
    return %arg0, %c0_i32 : i32, i32
  }
}

</mosaic_0001>

<llo_original>
// kernel: tpu_custom_call.1
$region0: #{tpu_custom_call.1}
  #allocation0 [shape = 'u32[]', space=smem, size = 0x4, offset = 0x4, fixed_abs, tag = 'smem constant byte address 0x4 - core index']
  #allocation1 [shape = 'u32[72,128]{1,0:T(1,128)}', space=vmem, size = 0x9000, scoped, tag = 'internal scratch']
  %s0 = inlined_call_operand.vmem [shape: s32[32,4], index: 0, kind: input, shape index: {}]
  %s1 = inlined_call_operand.vmem [shape: f32[32,4], index: 1, kind: input, shape index: {}]
  %s2 = inlined_call_operand.vmem [shape: f32[4,64], index: 2, kind: input, shape index: {}]
  %s3 = inlined_call_operand.hbm [shape: f32[1,64], index: 3, kind: input, shape index: {}]
  %s4 = inlined_call_operand.vmem [shape: f32[64,128], index: 4, kind: input, shape index: {}]
  %s5 = inlined_call_operand.vmem [shape: f32[4,128], index: 5, kind: input, shape index: {}]
  %s6 = inlined_call_operand.hbm [shape: f32[32,128], index: 6, kind: output, shape index: {}]
  %s7 = sld [smem:[#allocation0]]
  $region61: #{tpu_custom_call.1} parent=0
    _
  %s9 = ssub.s32 1, %s7
  %s10 = scalar_select 0, %s9, %s7
  $region1: #{tpu_custom_call.1} parent=0
    #allocation2 [shape = 'u8[512]{0}', space=vmem, size = 0x400, scoped, tag = 'input window, operand 3, single buffered']
    #allocation3 [shape = 's32[2]{0}', space=sflag, size = 0x8, scoped, tag = 'scoped memory for tpu_custom_call.1']
    #allocation4 [shape = 's32[2]{0}', space=sflag, size = 0x8, scoped, tag = 'scoped memory for tpu_custom_call.1']
    #allocation5 [shape = 'u8[16384]{0}', space=vmem, size = 0x4000, scoped, tag = 'output window, operand 0']
    %11 = vsyncpa [#allocation3], 0
    %12 = vsyncpa [#allocation4], 0
    %s13 = scalar_lea.sflag [#allocation4], 1
    %14 = vsyncpa %s13, 0
    loop: start=0, step=1, limit=4
    $region2: #{tpu_custom_call.1} parent=1 // loop_pre_header
      _
    $region3: #{tpu_custom_call.1} parent=1 // loop_header
      %s16 = sphi 0, %s20
      %p17 = scmp.ge.s32.totalorder %s16, 4
      %s26 = sphi 0, %s28
      %s29 = sphi 0, %s26
      %s30 = sphi 0, %s29
      %s46 = sphi 0, %s30
      %s52 = sphi 0, %s54
      %s55 = sphi 0, %s52
      %s56 = sphi 0, %s55
      %s72 = sphi 0, %s56
      %s76 = sphi 0, %s76
      %s78 = sphi 0, %s76
      %s79 = sphi 0, %s78
      %s93 = sphi 0, %s79
      %s97 = sphi 0, %s97
      %s99 = sphi 0, %s97
      %s100 = sphi 0, %s99
      %s114 = sphi 0, %s100
      %s118 = sphi 0, %s118
      %s120 = sphi 0, %s118
      %s121 = sphi 0, %s120
      %s135 = sphi 0, %s121
      %s139 = sphi 0, %s139
      %s141 = sphi 0, %s139
      %s142 = sphi 0, %s141
      %s156 = sphi 0, %s142
      %s162 = sphi 0, %s164
      %s165 = sphi 0, %s162
      %s166 = sphi 0, %s165
      %s182 = sphi 0, %s166
    $region4: #{tpu_custom_call.1} parent=1 // loop_header_branch
      %19 = sbr.rel (%p17) target = $region8
    $region5: #{tpu_custom_call.1} parent=1 // loop_body
      %s21 = ssub.s32 %s16, 1
      %s22 = ssub.s32 %s16, 2
      %s23 = sadd.s32 %s16, 1
      %s24 = ssub.s32 %s16, %s23
      %p25 = scmp.eq.s32.totalorder %s24, 0
      %s27 = sadd.s32 %s26, 1
      %s28 = scalar_select %p25, %s26, %s27
      %p31 = pneg %p25
      %p32 = scmp.eq.s32.totalorder %s16, 1
      %p33 = por %p31, %p32
      %p34 = scmp.ne.s32.totalorder %s26, %s29
      %p35 = scmp.eq.s32.totalorder %s16, 0
      %p36 = por %p34, %p35
      %p37 = scmp.ne.s32.totalorder %s26, %s29
      %p38 = scmp.eq.s32.totalorder %s21, 1
      %p39 = por %p37, %p38
      %p40 = scmp.ne.s32.totalorder %s29, %s30
      %p41 = scmp.eq.s32.totalorder %s21, 0
      %p42 = por %p40, %p41
      %p43 = scmp.ne.s32.totalorder %s29, %s30
      %p44 = scmp.eq.s32.totalorder %s22, 1
      %p45 = por %p43, %p44
      %p47 = scmp.ne.s32.totalorder %s30, %s46
      %p48 = scmp.eq.s32.totalorder %s22, 0
      %p49 = por %p47, %p48
      %s50 = ssub.s32 %s16, %s23
      %p51 = scmp.eq.s32.totalorder %s50, 0
      %s53 = sadd.s32 %s52, 1
      %s54 = scalar_select %p51, %s52, %s53
      %p57 = pneg %p51
      %p58 = scmp.eq.s32.totalorder %s16, 1
      %p59 = por %p57, %p58
      %p60 = scmp.ne.s32.totalorder %s52, %s55
      %p61 = scmp.eq.s32.totalorder %s16, 0
      %p62 = por %p60, %p61
      %p63 = scmp.ne.s32.totalorder %s52, %s55
      %p64 = scmp.eq.s32.totalorder %s21, 1
      %p65 = por %p63, %p64
      %p66 = scmp.ne.s32.totalorder %s55, %s56
      %p67 = scmp.eq.s32.totalorder %s21, 0
      %p68 = por %p66, %p67
      %p69 = scmp.ne.s32.totalorder %s55, %s56
      %p70 = scmp.eq.s32.totalorder %s22, 1
      %p71 = por %p69, %p70
      %p73 = scmp.ne.s32.totalorder %s56, %s72
      %p74 = scmp.eq.s32.totalorder %s22, 0
      %p75 = por %p73, %p74
      %s77 = sadd.s32 %s76, 1
      %p80 = scmp.eq.s32.totalorder %s16, 1
      %p81 = scmp.ne.s32.totalorder %s76, %s78
      %p82 = scmp.eq.s32.totalorder %s16, 0
      %p83 = por %p81, %p82
      %p84 = scmp.ne.s32.totalorder %s76, %s78
      %p85 = scmp.eq.s32.totalorder %s21, 1
      %p86 = por %p84, %p85
      %p87 = scmp.ne.s32.totalorder %s78, %s79
      %p88 = scmp.eq.s32.totalorder %s21, 0
      %p89 = por %p87, %p88
      %p90 = scmp.ne.s32.totalorder %s78, %s79
      %p91 = scmp.eq.s32.totalorder %s22, 1
      %p92 = por %p90, %p91
      %p94 = scmp.ne.s32.totalorder %s79, %s93
      %p95 = scmp.eq.s32.totalorder %s22, 0
      %p96 = por %p94, %p95
      %s98 = sadd.s32 %s97, 1
      %p101 = scmp.eq.s32.totalorder %s16, 1
      %p102 = scmp.ne.s32.totalorder %s97, %s99
      %p103 = scmp.eq.s32.totalorder %s16, 0
      %p104 = por %p102, %p103
      %p105 = scmp.ne.s32.totalorder %s97, %s99
      %p106 = scmp.eq.s32.totalorder %s21, 1
      %p107 = por %p105, %p106
      %p108 = scmp.ne.s32.totalorder %s99, %s100
      %p109 = scmp.eq.s32.totalorder %s21, 0
      %p110 = por %p108, %p109
      %p111 = scmp.ne.s32.totalorder %s99, %s100
      %p112 = scmp.eq.s32.totalorder %s22, 1
      %p113 = por %p111, %p112
      %p115 = scmp.ne.s32.totalorder %s100, %s114
      %p116 = scmp.eq.s32.totalorder %s22, 0
      %p117 = por %p115, %p116
      %s119 = sadd.s32 %s118, 1
      %p122 = scmp.eq.s32.totalorder %s16, 1
      %p123 = scmp.ne.s32.totalorder %s118, %s120
      %p124 = scmp.eq.s32.totalorder %s16, 0
      %p125 = por %p123, %p124
      %p126 = scmp.ne.s32.totalorder %s118, %s120
      %p127 = scmp.eq.s32.totalorder %s21, 1
      %p128 = por %p126, %p127
      %p129 = scmp.ne.s32.totalorder %s120, %s121
      %p130 = scmp.eq.s32.totalorder %s21, 0
      %p131 = por %p129, %p130
      %p132 = scmp.ne.s32.totalorder %s120, %s121
      %p133 = scmp.eq.s32.totalorder %s22, 1
      %p134 = por %p132, %p133
      %p136 = scmp.ne.s32.totalorder %s121, %s135
      %p137 = scmp.eq.s32.totalorder %s22, 0
      %p138 = por %p136, %p137
      %s140 = sadd.s32 %s139, 1
      %p143 = scmp.eq.s32.totalorder %s16, 1
      %p144 = scmp.ne.s32.totalorder %s139, %s141
      %p145 = scmp.eq.s32.totalorder %s16, 0
      %p146 = por %p144, %p145
      %p147 = scmp.ne.s32.totalorder %s139, %s141
      %p148 = scmp.eq.s32.totalorder %s21, 1
      %p149 = por %p147, %p148
      %p150 = scmp.ne.s32.totalorder %s141, %s142
      %p151 = scmp.eq.s32.totalorder %s21, 0
      %p152 = por %p150, %p151
      %p153 = scmp.ne.s32.totalorder %s141, %s142
      %p154 = scmp.eq.s32.totalorder %s22, 1
      %p155 = por %p153, %p154
      %p157 = scmp.ne.s32.totalorder %s142, %s156
      %p158 = scmp.eq.s32.totalorder %s22, 0
      %p159 = por %p157, %p158
      %s160 = ssub.s32 %s16, %s23
      %p161 = scmp.eq.s32.totalorder %s160, 0
      %s163 = sadd.s32 %s162, 1
      %s164 = scalar_select %p161, %s162, %s163
      %p167 = pneg %p161
      %p168 = scmp.eq.s32.totalorder %s16, 1
      %p169 = por %p167, %p168
      %p170 = scmp.ne.s32.totalorder %s162, %s165
      %p171 = scmp.eq.s32.totalorder %s16, 0
      %p172 = por %p170, %p171
      %p173 = scmp.ne.s32.totalorder %s162, %s165
      %p174 = scmp.eq.s32.totalorder %s21, 1
      %p175 = por %p173, %p174
      %p176 = scmp.ne.s32.totalorder %s165, %s166
      %p177 = scmp.eq.s32.totalorder %s21, 0
      %p178 = por %p176, %p177
      %p179 = scmp.ne.s32.totalorder %s165, %s166
      %p180 = scmp.eq.s32.totalorder %s22, 1
      %p181 = por %p179, %p180
      %p183 = scmp.ne.s32.totalorder %s166, %s182
      %p184 = scmp.eq.s32.totalorder %s22, 0
      %p185 = por %p183, %p184
      %p186 = scmp.le.s32.totalorder 1, %s16
      %p187 = scmp.lt.s32.totalorder %s16, 3
      %p188 = pnand %p186, %p187
      %p189 = pneg %p188
      // Predicated region
      $region9: #{tpu_custom_call.1} parent=5 // pred_check
        _
      $region10: #{tpu_custom_call.1} parent=5 // pred_check_branch
        %191 = sbr.rel (%p188) target = $region12
      $region11: #{tpu_custom_call.1} parent=5 // pred_region
        %s192 = ssub.s32 %s16, 1
        // Predicated region
        $region13: #{tpu_custom_call.1} parent=11 // pred_check
          %p193 = pneg %p89
        $region14: #{tpu_custom_call.1} parent=11 // pred_check_branch
          %195 = sbr.rel (%p193) target = $region16
        $region15: #{tpu_custom_call.1} parent=11 // pred_region
          _
        $region16: #{tpu_custom_call.1} parent=11 // pred_fallthru
          _
        // Predicated region
        $region17: #{tpu_custom_call.1} parent=11 // pred_check
          %p196 = pneg %p110
        $region18: #{tpu_custom_call.1} parent=11 // pred_check_branch
          %198 = sbr.rel (%p196) target = $region20
        $region19: #{tpu_custom_call.1} parent=11 // pred_region
          %200 = vsyncadd [#allocation3], 0
          %s202 = sshll.u32 %s3, 4
          %s203 = int_to_ptr.hbm [resolvable:$true] %s202
          %s204 = sshll.u32 [#allocation2], 4
          %s205 = int_to_ptr.vmem [resolvable:$true] %s204
          %207 = dma.hbm_to_vmem [thread:$0]  %s203, 16, %s205, [#allocation3]
        $region20: #{tpu_custom_call.1} parent=11 // pred_fallthru
          _
        // Predicated region
        $region21: #{tpu_custom_call.1} parent=11 // pred_check
          %p208 = pneg %p131
        $region22: #{tpu_custom_call.1} parent=11 // pred_check_branch
          %210 = sbr.rel (%p208) target = $region24
        $region23: #{tpu_custom_call.1} parent=11 // pred_region
          _
        $region24: #{tpu_custom_call.1} parent=11 // pred_fallthru
          _
        // Predicated region
        $region25: #{tpu_custom_call.1} parent=11 // pred_check
          %p211 = pneg %p152
        $region26: #{tpu_custom_call.1} parent=11 // pred_check_branch
          %213 = sbr.rel (%p211) target = $region28
        $region27: #{tpu_custom_call.1} parent=11 // pred_region
          _
        $region28: #{tpu_custom_call.1} parent=11 // pred_fallthru
          _
      $region12: #{tpu_custom_call.1} parent=5 // pred_fallthru
        _
      %p214 = scmp.lt.s32.totalorder %s16, 2
      // Predicated region
      $region29: #{tpu_custom_call.1} parent=5 // pred_check
        %p215 = pneg %p214
      $region30: #{tpu_custom_call.1} parent=5 // pred_check_branch
        %217 = sbr.rel (%p215) target = $region32
      $region31: #{tpu_custom_call.1} parent=5 // pred_region
        // Predicated region
        $region33: #{tpu_custom_call.1} parent=31 // pred_check
          %p218 = pneg %p36
        $region34: #{tpu_custom_call.1} parent=31 // pred_check_branch
          %220 = sbr.rel (%p218) target = $region36
        $region35: #{tpu_custom_call.1} parent=31 // pred_region
          %s221 = smul.u32 2, %s16
          %p222 = scmp.lt.s32.totalorder %s221, 3
          %s223 = scalar_select %p222, %s221, 3
          %s224 = smul.addr %s223, 8
          %s225 = scalar_lea.vmem %s0, %s224
          %s226 = smul.u32 2, %s16
        $region36: #{tpu_custom_call.1} parent=31 // pred_fallthru
          _
        // Predicated region
        $region37: #{tpu_custom_call.1} parent=31 // pred_check
          %p227 = pneg %p62
        $region38: #{tpu_custom_call.1} parent=31 // pred_check_branch
          %229 = sbr.rel (%p227) target = $region40
        $region39: #{tpu_custom_call.1} parent=31 // pred_region
          %s230 = smul.u32 2, %s16
          %p231 = scmp.lt.s32.totalorder %s230, 3
          %s232 = scalar_select %p231, %s230, 3
          %s233 = smul.addr %s232, 8
          %s234 = scalar_lea.vmem %s1, %s233
          %s235 = smul.u32 2, %s16
        $region40: #{tpu_custom_call.1} parent=31 // pred_fallthru
          _
      $region32: #{tpu_custom_call.1} parent=5 // pred_fallthru
        _
      %p236 = scmp.le.s32.totalorder 1, %s16
      %p237 = scmp.lt.s32.totalorder %s16, 3
      %p238 = pnand %p236, %p237
      %p239 = pneg %p238
      // Predicated region
      $region41: #{tpu_custom_call.1} parent=5 // pred_check
        _
      $region42: #{tpu_custom_call.1} parent=5 // pred_check_branch
        %241 = sbr.rel (%p238) target = $region44
      $region43: #{tpu_custom_call.1} parent=5 // pred_region
        %s242 = ssub.s32 %s16, 1
        // Predicated region
        $region45: #{tpu_custom_call.1} parent=43 // pred_check
          %p243 = pneg %p110
        $region46: #{tpu_custom_call.1} parent=43 // pred_check_branch
          %245 = sbr.rel (%p243) target = $region48
        $region47: #{tpu_custom_call.1} parent=43 // pred_region
          %247 = dma.done [#allocation3], 16
        $region48: #{tpu_custom_call.1} parent=43 // pred_fallthru
          _
        %s248 = smul.u32 2, %s21
        %p249 = scmp.lt.s32.totalorder %s248, 3
        %s250 = scalar_select %p249, %s248, 3
        %s251 = smul.addr %s250, 8
        %s252 = scalar_lea.vmem %s0, %s251
        %p253 = pneg %p42
        %p254 = pneg %p39
        %s255 = smul.u32 2, %s21
        %p256 = scmp.lt.s32.totalorder %s255, 3
        %s257 = scalar_select %p256, %s255, 3
        %s258 = smul.addr %s257, 8
        %s259 = scalar_lea.vmem %s1, %s258
        %p260 = pneg %p68
        %p261 = pneg %p65
        %p262 = pneg %p89
        %p263 = pneg %p86
        %p264 = pneg %p110
        %p265 = pneg %p107
        %p266 = pneg %p131
        %p267 = pneg %p128
        %p268 = pneg %p152
        %p269 = pneg %p149
        %p270 = pneg %p178
        %p271 = pneg %p175
        %s272 = sand.u32 %s165, 1
        %s273 = scalar_lea.sflag [#allocation4], %s272
        %s274 = sand.u32 %s165, 1
        %s275 = smul.addr %s274, 16
        %s276 = scalar_lea.vmem [#allocation5], %s275
        %s277 = smul.u32 2, %s21
        %p278 = scmp.lt.s32.totalorder %s277, 3
        %s279 = scalar_select %p278, %s277, 3
        %s280 = smul.addr %s279, 8
        %s281 = scalar_lea.vmem %s0, %s280
        %s282 = smul.u32 2, %s21
        %s283 = smul.u32 2, %s21
        %p284 = scmp.lt.s32.totalorder %s283, 3
        %s285 = scalar_select %p284, %s283, 3
        %s286 = smul.addr %s285, 8
        %s287 = scalar_lea.vmem %s1, %s286
        %s288 = smul.u32 2, %s21
        %s289 = smul.u32 2, %s21
        %v290 = vld [vmem:[%s281] sm:$0xff]
        %v291 = vld [vmem:[%s281 + $0x8] sm:$0xff]
        %v292 = vcvt.s32.f32 %v290
        %v293 = vcvt.s32.f32 %v291
        %v294 = vld [vmem:[%s2] sm:$0xf]
        %vm295 = vcmask 31744
        %v297 = vsel %vm295, %v292, 0
        %v300 = vsel %vm295, %v293, 0
        %vm302 = vcmask 1043456
        %v304 = vsel %vm302, %v294, 0
        %306 = vmatpush.msra.mxu0 0.0
        %307 = vmatpush.msra.mxu0 0.0
        %308 = vmatpush.msra.mxu0 0.0
        %309 = vmatpush.msra.mxu0 0.0
        %310 = vmatpush.msra.mxu0 0.0
        %311 = vmatpush.msra.mxu0 0.0
        %312 = vmatpush.msra.mxu0 0.0
        %313 = vmatpush.msra.mxu0 0.0
        %314 = vmatpush.msra.mxu0 0.0
        %315 = vmatpush.msra.mxu0 0.0
        %316 = vmatpush.msra.mxu0 0.0
        %317 = vmatpush.msra.mxu0 0.0
        %318 = vmatpush.msra.mxu0 0.0
        %319 = vmatpush.msra.mxu0 0.0
        %320 = vmatpush.msra.mxu0 0.0
        %321 = vmatpush.msra.mxu0 %v304
        %322 = vmatmul.f32.gmra.mxu0 %v297
        %v323 = vpop.f32.mrf.mxu0
        %v324 = vadd.f32 0.0, %v323
        %325 = vmatmul.f32.gmra.mxu0 %v300
        %v326 = vpop.f32.mrf.mxu0
        %v327 = vadd.f32 0.0, %v326
        %328 = vdwg.mxu0
        %v329 = vld [vmem:[#allocation2] sm:$0x1]
        %v331 = vperm.slane %v329, 0
        %vm333 = vcmp.eq.f32.partialorder %v324, %v331
        %vm334 = vcmp.eq.f32.partialorder %v327, %v331
        %v335 = vsel %vm333, 1, 0
        %v336 = vsel %vm334, 1, 0
        %v337 = vcvt.s32.f32 %v335
        %v338 = vcvt.s32.f32 %v336
        %v339 = vld [vmem:[%s4] sm:$0xff]
        %v340 = vld [vmem:[%s4 + $0x8] sm:$0xff]
        %v341 = vld [vmem:[%s4 + $0x10] sm:$0xff]
        %v342 = vld [vmem:[%s4 + $0x18] sm:$0xff]
        %v343 = vld [vmem:[%s4 + $0x20] sm:$0xff]
        %v344 = vld [vmem:[%s4 + $0x28] sm:$0xff]
        %v345 = vld [vmem:[%s4 + $0x30] sm:$0xff]
        %v346 = vld [vmem:[%s4 + $0x38] sm:$0xff]
        %vm347 = vcmask 523264
        %v349 = vsel %vm347, %v337, 0
        %v352 = vsel %vm347, %v338, 0
        %354 = vmatpush.msra.mxu0 0.0
        %355 = vmatpush.msra.mxu0 0.0
        %356 = vmatpush.msra.mxu0 0.0
        %357 = vmatpush.msra.mxu0 0.0
        %358 = vmatpush.msra.mxu0 0.0
        %359 = vmatpush.msra.mxu0 0.0
        %360 = vmatpush.msra.mxu0 0.0
        %361 = vmatpush.msra.mxu0 0.0
        %362 = vmatpush.msra.mxu0 %v346
        %363 = vmatpush.msra.mxu0 %v345
        %364 = vmatpush.msra.mxu0 %v344
        %365 = vmatpush.msra.mxu0 %v343
        %366 = vmatpush.msra.mxu0 %v342
        %367 = vmatpush.msra.mxu0 %v341
        %368 = vmatpush.msra.mxu0 %v340
        %369 = vmatpush.msra.mxu0 %v339
        %370 = vmatmul.f32.gmra.mxu0 %v349
        %v371 = vpop.f32.mrf.mxu0
        %v372 = vadd.f32 0.0, %v371
        %373 = vmatmul.f32.gmra.mxu0 %v352
        %v374 = vpop.f32.mrf.mxu0
        %v375 = vadd.f32 0.0, %v374
        %376 = vdwg.mxu0
        %v377 = vld [vmem:[%s287] sm:$0xff]
        %v378 = vld [vmem:[%s287 + $0x8] sm:$0xff]
        %v379 = vld [vmem:[%s5] sm:$0xf]
        %v381 = vsel %vm295, %v377, 0
        %v384 = vsel %vm295, %v378, 0
        %v387 = vsel %vm302, %v379, 0
        %389 = vmatpush.msra.mxu0 0.0
        %390 = vmatpush.msra.mxu0 0.0
        %391 = vmatpush.msra.mxu0 0.0
        %392 = vmatpush.msra.mxu0 0.0
        %393 = vmatpush.msra.mxu0 0.0
        %394 = vmatpush.msra.mxu0 0.0
        %395 = vmatpush.msra.mxu0 0.0
        %396 = vmatpush.msra.mxu0 0.0
        %397 = vmatpush.msra.mxu0 0.0
        %398 = vmatpush.msra.mxu0 0.0
        %399 = vmatpush.msra.mxu0 0.0
        %400 = vmatpush.msra.mxu0 0.0
        %401 = vmatpush.msra.mxu0 0.0
        %402 = vmatpush.msra.mxu0 0.0
        %403 = vmatpush.msra.mxu0 0.0
        %404 = vmatpush.msra.mxu0 %v387
        %405 = vmatmul.f32.gmra.mxu0 %v381
        %v406 = vpop.f32.mrf.mxu0
        %v407 = vadd.f32 0.0, %v406
        %408 = vmatmul.f32.gmra.mxu0 %v384
        %v409 = vpop.f32.mrf.mxu0
        %v410 = vadd.f32 0.0, %v409
        %411 = vdwg.mxu0
        %v412 = vadd.f32 %v372, %v407
        %v413 = vadd.f32 %v375, %v410
        %vm414 = vcmp.ne.f32.partialorder %v372, 0.0
        %vm415 = vcmp.ne.f32.partialorder %v375, 0.0
        %v416 = vsel %vm414, 1, 0
        %v417 = vsel %vm415, 1, 0
        %v418 = vcvt.s32.f32 %v416
        %v419 = vcvt.s32.f32 %v417
        %v420 = vmul.f32 %v412, %v418
        %v421 = vmul.f32 %v413, %v419
        %422 = vst [vmem:[%s276] sm:$0xff] %v420
        %423 = vst [vmem:[%s276 + $0x8] sm:$0xff] %v421
        %s424 = sand.u32 %s165, 1
        %s425 = scalar_lea.sflag [#allocation4], %s424
        %s426 = sand.u32 %s165, 1
        %s427 = smul.addr %s426, 16
        %s428 = scalar_lea.vmem [#allocation5], %s427
        // Predicated region
        $region49: #{tpu_custom_call.1} parent=43 // pred_check
          %p429 = pneg %p175
        $region50: #{tpu_custom_call.1} parent=43 // pred_check_branch
          %431 = sbr.rel (%p429) target = $region52
        $region51: #{tpu_custom_call.1} parent=43 // pred_region
          %s432 = smul.u32 2, %s21
          %434 = vsyncadd %s425, 0
          %s435 = smul.addr %s432, 8
          %s436 = scalar_lea.hbm %s6, %s435
          %s437 = sshll.u32 %s428, 4
          %s438 = int_to_ptr.vmem [resolvable:$true] %s437
          %s439 = sshll.u32 %s436, 4
          %s440 = int_to_ptr.hbm [resolvable:$true] %s439
          %445 = dma.vmem_to_hbm [thread:$0]  %s438, 256, %s440, %s425, 128, 128, 8
        $region52: #{tpu_custom_call.1} parent=43 // pred_fallthru
          _
      $region44: #{tpu_custom_call.1} parent=5 // pred_fallthru
        _
      %p446 = scmp.le.s32.totalorder 2, %s16
      // Predicated region
      $region53: #{tpu_custom_call.1} parent=5 // pred_check
        %p447 = pneg %p446
      $region54: #{tpu_custom_call.1} parent=5 // pred_check_branch
        %449 = sbr.rel (%p447) target = $region56
      $region55: #{tpu_custom_call.1} parent=5 // pred_region
        %s450 = ssub.s32 %s16, 2
        // Predicated region
        $region57: #{tpu_custom_call.1} parent=55 // pred_check
          %p451 = pneg %p181
        $region58: #{tpu_custom_call.1} parent=55 // pred_check_branch
          %453 = sbr.rel (%p451) target = $region60
        $region59: #{tpu_custom_call.1} parent=55 // pred_region
          %s454 = sand.u32 %s166, 1
          %s455 = scalar_lea.sflag [#allocation4], %s454
          %s456 = sand.u32 %s166, 1
          %s457 = smul.addr %s456, 16
          %s458 = scalar_lea.vmem [#allocation5], %s457
          %460 = dma.done %s455, 256
        $region60: #{tpu_custom_call.1} parent=55 // pred_fallthru
          _
      $region56: #{tpu_custom_call.1} parent=5 // pred_fallthru
        _
    $region6: #{tpu_custom_call.1} parent=1 // loop_footer
      %s20 = sadd.s32 1, %s16
    $region7: #{tpu_custom_call.1} parent=1 // loop_footer_branch
      %15 = sbr.rel target = $region3
    $region8: #{tpu_custom_call.1} parent=1 // loop_exit
      _
    %461 = vsyncpa [#allocation3], 1
    %s462 = scalar_lea.sflag [#allocation3], 1
    %463 = vsyncpa %s462, 1
    %464 = vsyncpa [#allocation4], 1
    %s465 = scalar_lea.sflag [#allocation4], 1
    %466 = vsyncpa %s465, 1

</llo_original>
